<compile_context>
chip_gen: v6e
topology: v6e:2x2x1
jax: 0.10.0
libtpu: 0.0.40
codegen_flags: <defaults>
</compile_context>

<pallas_src>
import math
import functools

import jax
import jax.numpy as jnp
from jax.experimental import pallas as pl
from jax.experimental.pallas import tpu as pltpu

BN_EPS = 1e-5
# eval-mode BatchNorm right after init: running_mean=0, running_var=1, gamma=1, beta=0
BN_SCALE = 1.0 / math.sqrt(1.0 + BN_EPS)

ACT_DTYPE = jnp.bfloat16  # activations + matmul weights (MXU-native); accumulation in f32


def _round_up(x, m):
    return ((x + m - 1) // m) * m


# ----------------------------- fused matmul kernel -----------------------------
# out = act((x @ w) + bias  [res-op residual]) with the eval-BN scale already folded
# into w, so no per-column scale vector is needed.

def _mm_body(act, res, has_bias, *refs):
    refs = list(refs)
    x_ref = refs.pop(0)
    w_ref = refs.pop(0)
    b_ref = refs.pop(0) if has_bias else None
    r_ref = refs.pop(0) if res != "none" else None
    o_ref = refs.pop(0)

    acc = jnp.dot(x_ref[...], w_ref[...], preferred_element_type=jnp.float32)
    if b_ref is not None:
        acc = acc + b_ref[...]
    if res in ("add", "add_relu"):
        acc = acc + r_ref[...].astype(jnp.float32)
    elif res == "mul":
        acc = acc * r_ref[...].astype(jnp.float32)
    if act == "relu" or res == "add_relu":
        acc = jnp.maximum(acc, 0.0)
    elif act == "sigmoid":
        acc = jax.nn.sigmoid(acc)
    o_ref[...] = acc.astype(o_ref.dtype)


@functools.lru_cache(maxsize=None)
def _matmul_call(M, K, N, TM, act, res, has_bias):
    in_specs = [pl.BlockSpec((TM, K), lambda i: (i, 0)),
                pl.BlockSpec((K, N), lambda i: (0, 0))]
    if has_bias:
        in_specs.append(pl.BlockSpec((1, N), lambda i: (0, 0)))
    if res != "none":
        in_specs.append(pl.BlockSpec((TM, N), lambda i: (i, 0)))
    return pl.pallas_call(
        functools.partial(_mm_body, act, res, has_bias),
        out_shape=jax.ShapeDtypeStruct((M, N), ACT_DTYPE),
        grid=(M // TM,),
        in_specs=in_specs,
        out_specs=pl.BlockSpec((TM, N), lambda i: (i, 0)),
        compiler_params=pltpu.CompilerParams(dimension_semantics=("parallel",)),
    )


def matmul_fused(x, w, bias=None, act="none", res="none", residual=None):
    """y = act((x @ w) + bias [res residual]); bf16 MXU inputs, f32 accumulation."""
    M, K = x.shape
    Kw, N = w.shape
    assert K == Kw
    has_bias = bias is not None
    # Row tile: 512 for pipelining / HBM roofline; shrink to (16-aligned) M for small inputs.
    # Tiles divide M exactly for every layer in this net, so no padding copies in practice
    # (only the 2-row fc input gets a tiny 16-row pad).
    Mp = _round_up(M, 16)
    TM = min(512, Mp)
    Mp = _round_up(Mp, TM)
    xb = x.astype(ACT_DTYPE)
    args = [xb if Mp == M else jnp.pad(xb, ((0, Mp - M), (0, 0))),
            w.astype(ACT_DTYPE)]
    if has_bias:
        args.append(bias.reshape(1, N).astype(jnp.float32))
    if res != "none":
        rb = residual.astype(ACT_DTYPE)
        args.append(rb if Mp == M else jnp.pad(rb, ((0, Mp - M), (0, 0))))
    out = _matmul_call(Mp, K, N, TM, act, res, has_bias)(*args)
    return out if Mp == M else out[:M]


# ----------------------------- depthwise 3x3 (VPU) kernel -----------------------------

def _dw_relu_kernel(x_ref, w_ref, o_ref):
    # x_ref: (1, H+2, W+2, C) bf16, w_ref: (3, 3, C) f32 (BN scale folded), out: (1, H, W, C)
    H, W = o_ref.shape[1], o_ref.shape[2]
    w = w_ref[...]
    acc = jnp.zeros(o_ref.shape, jnp.float32)
    for dh in range(3):
        for dw in range(3):
            tap = x_ref[:, dh:dh + H, dw:dw + W, :].astype(jnp.float32)
            acc = acc + tap * w[dh, dw, :]
    o_ref[...] = jnp.maximum(acc, 0.0).astype(o_ref.dtype)


@functools.lru_cache(maxsize=None)
def _dw_call(B, H, W, C):
    return pl.pallas_call(
        _dw_relu_kernel,
        out_shape=jax.ShapeDtypeStruct((B, H, W, C), ACT_DTYPE),
        grid=(B,),
        in_specs=[pl.BlockSpec((1, H + 2, W + 2, C), lambda b: (b, 0, 0, 0)),
                  pl.BlockSpec((3, 3, C), lambda b: (0, 0, 0))],
        out_specs=pl.BlockSpec((1, H, W, C), lambda b: (b, 0, 0, 0)),
        compiler_params=pltpu.CompilerParams(dimension_semantics=("parallel",)),
    )


def depthwise3x3_bn_relu(x, w33c):
    """Depthwise 3x3 (stride 1, pad 1) + folded eval-BN + ReLU as a pure-VPU kernel."""
    B, H, W, C = x.shape
    xp = jnp.pad(x.astype(ACT_DTYPE), ((0, 0), (1, 1), (1, 1), (0, 0)))
    return _dw_call(B, H, W, C)(xp, w33c.astype(jnp.float32))


# ----------------------------- pooling (reduce over patch axis) -----------------------------

def _pool_body(op, x_ref, o_ref):
    x = x_ref[...].astype(jnp.float32)
    if op == "max":
        o_ref[...] = jnp.max(x, axis=1).astype(o_ref.dtype)
    else:
        o_ref[...] = jnp.mean(x, axis=1).astype(o_ref.dtype)


@functools.lru_cache(maxsize=None)
def _pool_call(M, K, C, TM, op):
    return pl.pallas_call(
        functools.partial(_pool_body, op),
        out_shape=jax.ShapeDtypeStruct((M, C), ACT_DTYPE),
        grid=(M // TM,),
        in_specs=[pl.BlockSpec((TM, K, C), lambda i: (i, 0, 0))],
        out_specs=pl.BlockSpec((TM, C), lambda i: (i, 0)),
        compiler_params=pltpu.CompilerParams(dimension_semantics=("parallel",)),
    )


def pool_reduce(x, op):
    """x: (M, K, C) -> reduce (max/mean, f32 accumulation) over axis 1 -> (M, C)."""
    M, K, C = x.shape
    TM = M if M <= 512 else 512
    Mp = _round_up(M, TM)
    xb = x.astype(ACT_DTYPE)
    if Mp != M:
        xb = jnp.pad(xb, ((0, Mp - M), (0, 0), (0, 0)))
    out = _pool_call(Mp, K, C, TM, op)(xb)
    return out if Mp == M else out[:M]


def _extract_patches(x, kh, kw, stride, padding, pad_value=0.0):
    B, H, W, C = x.shape
    xp = x if padding == 0 else jnp.pad(
        x, ((0, 0), (padding, padding), (padding, padding), (0, 0)),
        constant_values=pad_value)
    OH = (H + 2 * padding - kh) // stride + 1
    OW = (W + 2 * padding - kw) // stride + 1
    rows = (jnp.arange(OH) * stride)[:, None] + jnp.arange(kh)[None, :]
    cols = (jnp.arange(OW) * stride)[:, None] + jnp.arange(kw)[None, :]
    p = xp[:, rows]                              # (B, OH, kh, Wp, C)
    p = p[:, :, :, cols]                         # (B, OH, kh, OW, kw, C)
    p = jnp.transpose(p, (0, 1, 3, 2, 4, 5))     # (B, OH, OW, kh, kw, C)
    return p, OH, OW


def maxpool2d(x, k, stride, padding=0):
    B, H, W, C = x.shape
    patches, OH, OW = _extract_patches(x, k, k, stride, padding, pad_value=-jnp.inf)
    out = pool_reduce(patches.reshape(B * OH * OW, k * k, C), "max")
    return out.reshape(B, OH, OW, C)


def avgpool2d(x, k, stride, padding=0):
    # padding=0 everywhere in this net, so count_include_pad is moot.
    B, H, W, C = x.shape
    patches, OH, OW = _extract_patches(x, k, k, stride, padding, pad_value=0.0)
    out = pool_reduce(patches.reshape(B * OH * OW, k * k, C), "mean")
    return out.reshape(B, OH, OW, C)


def global_avgpool(x):
    B, H, W, C = x.shape
    return pool_reduce(x.reshape(B, H * W, C), "mean")


# ----------------------------- fused gate-multiply (+accumulate) -----------------------------

def _gate_mul_body(with_acc, *refs):
    if with_acc:
        h_ref, g_ref, a_ref, o_ref = refs
    else:
        h_ref, g_ref, o_ref = refs
    y = h_ref[...].astype(jnp.float32) * g_ref[...].astype(jnp.float32)  # (1,HW,C)*(1,1,C)
    if with_acc:
        y = y + a_ref[...].astype(jnp.float32)
    o_ref[...] = y.astype(o_ref.dtype)


@functools.lru_cache(maxsize=None)
def _gate_mul_call(B, HW, C, with_acc):
    in_specs = [pl.BlockSpec((1, HW, C), lambda b: (b, 0, 0)),
                pl.BlockSpec((1, 1, C), lambda b: (b, 0, 0))]
    if with_acc:
        in_specs.append(pl.BlockSpec((1, HW, C), lambda b: (b, 0, 0)))
    return pl.pallas_call(
        functools.partial(_gate_mul_body, with_acc),
        out_shape=jax.ShapeDtypeStruct((B, HW, C), ACT_DTYPE),
        grid=(B,),
        in_specs=in_specs,
        out_specs=pl.BlockSpec((1, HW, C), lambda b: (b, 0, 0)),
        compiler_params=pltpu.CompilerParams(dimension_semantics=("parallel",)),
    )


def gate_mul(h, g, acc=None):
    """(acc +) h * g[:, None, None, :] in one Pallas pass (no broadcast materialization)."""
    B, H, W, C = h.shape
    args = [h.reshape(B, H * W, C).astype(ACT_DTYPE),
            g.reshape(B, 1, C).astype(jnp.float32)]
    if acc is not None:
        args.append(acc.reshape(B, H * W, C).astype(ACT_DTYPE))
    out = _gate_mul_call(B, H * W, C, acc is not None)(*args)
    return out.reshape(B, H, W, C)


# ----------------------------- lane-dense elementwise kernel -----------------------------

def _ew_body(op, act, a_ref, b_ref, o_ref):
    a = a_ref[...].astype(jnp.float32)
    b = b_ref[...].astype(jnp.float32)
    y = a + b if op == "add" else a * b
    if act == "relu":
        y = jnp.maximum(y, 0.0)
    elif act == "sigmoid":
        y = jax.nn.sigmoid(y)
    o_ref[...] = y.astype(o_ref.dtype)


@functools.lru_cache(maxsize=None)
def _ew_call(R, L, op, act):
    # Only used on tiny tensors (SCConv gate); single lane-dense block.
    return pl.pallas_call(
        functools.partial(_ew_body, op, act),
        out_shape=jax.ShapeDtypeStruct((R, L), ACT_DTYPE),
        grid=(1,),
        in_specs=[pl.BlockSpec((R, L), lambda i: (0, 0))] * 2,
        out_specs=pl.BlockSpec((R, L), lambda i: (0, 0)),
    )


def elementwise(a, b, op="add", act="none"):
    shape = a.shape
    total = a.size
    L = next((l for l in (1024, 512, 256, 128) if total % l == 0), shape[-1])
    R = total // L
    out = _ew_call(R, L, op, act)(a.reshape(R, L).astype(ACT_DTYPE),
                                  b.reshape(R, L).astype(ACT_DTYPE))
    return out.reshape(shape)


# ----------------------------- conv wrapper -----------------------------

def conv2d(x, wmat, bias=None, ksize=1, stride=1, padding=0,
           act="none", res="none", residual=None):
    """Conv (+ folded eval-BN) + activation, optionally fusing a residual add/mul epilogue.

    wmat is pre-laid-out at parameter-build time: (Cin, Cout) for 1x1 convs,
    (K*K*Cin, Cout) in im2col order otherwise, with BN scale already multiplied in.
    """
    B, H, W, C = x.shape
    if ksize == 1 and stride == 1 and padding == 0:
        pm = x.reshape(B * H * W, C)             # 1x1 fast path: no im2col
        OH, OW = H, W
    else:
        patches, OH, OW = _extract_patches(x, ksize, ksize, stride, padding)
        pm = patches.reshape(B * OH * OW, ksize * ksize * C)
    r = residual.reshape(B * OH * OW, -1) if residual is not None else None
    out = matmul_fused(pm, wmat, bias=bias, act=act, res=res, residual=r)
    return out.reshape(B, OH, OW, wmat.shape[1])


# ----------------------------- parameters -----------------------------

class PRNG:
    def __init__(self, seed=0):
        self._key = jax.random.PRNGKey(seed)

    def next(self):
        self._key, sub = jax.random.split(self._key)
        return sub


def _kaiming_oihw(rng, cout, cin, kh, kw):
    # kaiming_normal_(mode='fan_out', nonlinearity='relu')
    fan_out = cout * kh * kw
    std = math.sqrt(2.0 / fan_out)
    return (std * jax.random.normal(rng.next(), (cout, cin, kh, kw))).astype(jnp.float32)


def conv_matrix(rng, cout, cin, k, bn=True):
    """Matmul-ready (k*k*cin, cout) weight (im2col order) with eval-BN scale folded, bf16."""
    w = _kaiming_oihw(rng, cout, cin, k, k)
    wmat = jnp.transpose(w, (2, 3, 1, 0)).reshape(k * k * cin, cout)
    if bn:
        wmat = wmat * BN_SCALE
    return wmat.astype(ACT_DTYPE)


def dw_conv_weights(rng, c):
    """Depthwise 3x3 weight laid out (3, 3, C), eval-BN scale folded, f32 (VPU path)."""
    w = _kaiming_oihw(rng, c, 1, 3, 3)           # (C,1,3,3)
    w = jnp.transpose(w[:, 0], (1, 2, 0))        # (3,3,C)
    return (w * BN_SCALE).astype(jnp.float32)


def make_lightconv(rng, cin, cout):
    return {"w1": conv_matrix(rng, cout, cin, 1, bn=False),   # 1x1, no bias, no BN
            "wd": dw_conv_weights(rng, cout)}                 # depthwise 3x3 + BN + ReLU


def make_channel_gate(rng, c, reduction=16):
    mid = max(c // reduction, 1)
    w1 = _kaiming_oihw(rng, mid, c, 1, 1)[:, :, 0, 0]         # (mid, c)
    w2 = _kaiming_oihw(rng, c, mid, 1, 1)[:, :, 0, 0]         # (c, mid)
    return {"w1": w1.T, "b1": jnp.zeros((mid,), jnp.float32),
            "w2": w2.T, "b2": jnp.zeros((c,), jnp.float32)}


def make_osblock(rng, cin, cout):
    mid = cout // 4
    p = {"conv1": conv_matrix(rng, mid, cin, 1),
         "2a": [make_lightconv(rng, mid, mid)],
         "2b": [make_lightconv(rng, mid, mid) for _ in range(2)],
         "2c": [make_lightconv(rng, mid, mid) for _ in range(3)],
         "2d": [make_lightconv(rng, mid, mid) for _ in range(4)],
         "gate": make_channel_gate(rng, mid),
         "conv3": conv_matrix(rng, cout, mid, 1)}
    if cin != cout:
        p["down"] = conv_matrix(rng, cout, cin, 1)
    return p


def make_scbottleneck(rng, inplanes, planes, cardinality=1, bottleneck_width=32):
    gw = int(planes * (bottleneck_width / 64.0)) * cardinality
    wa = conv_matrix(rng, gw, inplanes, 1)
    wb = conv_matrix(rng, gw, inplanes, 1)
    return {"gw": gw,
            "conv1_ab": jnp.concatenate([wa, wb], axis=1),    # conv1_a/b packed: 1 matmul
            "k1": conv_matrix(rng, gw, gw, 3),
            "k2": conv_matrix(rng, gw, gw, 3),
            "k3": conv_matrix(rng, gw, gw, 3),
            "k4": conv_matrix(rng, gw, gw, 3),
            "conv3": conv_matrix(rng, planes * 4, gw * 2, 1)}


def make_scosnet_params(rng, num_classes, channels, layers, feature_dim):
    def make_stage(cin, cout, nlayers):
        blocks = [make_osblock(rng, cin, cout)]
        for _ in range(1, nlayers):
            blocks.append(make_osblock(rng, cout, cout))
        return {"blocks": blocks, "reduce": conv_matrix(rng, cout, cout, 1)}

    p = {"conv1": conv_matrix(rng, channels[0], 3, 7)}
    p["conv2"] = make_stage(channels[0], channels[1], layers[0])
    p["conv3"] = make_stage(channels[1], channels[2], layers[1])
    p["conv4"] = [make_scbottleneck(rng, channels[2], channels[2] // 4) for _ in range(2)]
    p["conv5"] = conv_matrix(rng, channels[3], channels[2], 1)
    # fc: Linear + BatchNorm1d(eval) + ReLU, BN scale folded into W and b
    fc_w = 0.01 * jax.random.normal(rng.next(), (feature_dim, channels[3]))
    p["fc_w"] = (fc_w.T * BN_SCALE).astype(ACT_DTYPE)
    p["fc_b"] = jnp.zeros((feature_dim,), jnp.float32)
    # classifier (unused in the eval forward, kept for parity with the PyTorch module)
    p["cls_w"] = (0.01 * jax.random.normal(rng.next(), (num_classes, feature_dim))).astype(jnp.float32)
    p["cls_b"] = jnp.zeros((num_classes,), jnp.float32)
    return p


# ----------------------------- network forward -----------------------------

def light_conv3x3(x, p):
    x = conv2d(x, p["w1"])                         # 1x1, no BN / act
    x = depthwise3x3_bn_relu(x, p["wd"])           # depthwise 3x3 + BN + ReLU (VPU kernel)
    return x


def channel_gate(x, p, acc=None):
    # Squeeze-and-excite: GAP (Pallas) -> two tiny FCs (hidden dim = max(C//16,1) = 1 here,
    # done in plain JAX since a 1-lane MXU tile is pure launch overhead) -> fused gate
    # multiply (+ branch accumulation) in Pallas.
    gap = global_avgpool(x).astype(jnp.float32)                     # (B, C)
    hdn = jnp.maximum(gap @ p["w1"] + p["b1"], 0.0)
    g = jax.nn.sigmoid(hdn @ p["w2"] + p["b2"])
    return gate_mul(x, g, acc=acc)


def os_block(x, p):
    x1 = conv2d(x, p["conv1"], act="relu")                          # Conv1x1 (+BN+ReLU)
    x2 = None
    for chain in (p["2a"], p["2b"], p["2c"], p["2d"]):              # shared gate params
        h = x1
        for lp in chain:
            h = light_conv3x3(h, lp)
        x2 = channel_gate(h, p["gate"], acc=x2)                     # gated branch + running sum
    identity = conv2d(x, p["down"]) if "down" in p else x           # Conv1x1Linear downsample
    # Conv1x1Linear + residual add + ReLU fused into one matmul epilogue
    return conv2d(x2, p["conv3"], res="add_relu", residual=identity)


def os_stage(x, p):
    for bp in p["blocks"]:
        x = os_block(x, bp)
    x = conv2d(x, p["reduce"], act="relu")                          # Conv1x1
    x = avgpool2d(x, 2, 2)                                          # AvgPool2d(2, 2)
    return x


def sc_conv(x, p):
    # SCConv: relu is applied by k4's epilogue (matches relu(scconv(out_b)) in the bottleneck)
    B, H, W, C = x.shape
    y = avgpool2d(x, 4, 4)                                          # pooling_r = 4
    y = conv2d(y, p["k2"], ksize=3, padding=1)                      # conv3x3 + BN
    h2, w2 = y.shape[1], y.shape[2]
    ri = jnp.arange(H) * h2 // H                                    # nearest interpolate
    ci = jnp.arange(W) * w2 // W
    y_up = y[:, ri][:, :, ci]
    gate = elementwise(x, y_up, op="add", act="sigmoid")
    out = conv2d(x, p["k3"], ksize=3, padding=1, res="mul", residual=gate)  # k3(x)*gate fused
    out = conv2d(out, p["k4"], ksize=3, padding=1, act="relu")
    return out


def sc_bottleneck(x, p):
    gw = p["gw"]
    out_ab = conv2d(x, p["conv1_ab"], act="relu")                   # conv1_a + conv1_b packed
    out_a, out_b = out_ab[..., :gw], out_ab[..., gw:]
    out_a = conv2d(out_a, p["k1"], ksize=3, padding=1, act="relu")  # k1 (+BN) then ReLU
    out_b = sc_conv(out_b, p)                                       # SCConv then ReLU
    out = jnp.concatenate([out_a, out_b], axis=-1)
    # Conv1x1 + BN + residual add + ReLU fused into one matmul epilogue
    return conv2d(out, p["conv3"], res="add_relu", residual=x)


def scosnet_forward(params, x_nchw):
    """Eval-mode SCOSNet forward (aligned=False): returns feature f of shape (B, feature_dim)."""
    x = jnp.transpose(x_nchw, (0, 2, 3, 1)).astype(ACT_DTYPE)       # NCHW -> NHWC, bf16
    x = conv2d(x, params["conv1"], ksize=7, stride=2, padding=3, act="relu")  # ConvLayer 7x7/2
    x = maxpool2d(x, 3, 2, 1)                                       # MaxPool2d(3, 2, 1)
    x = os_stage(x, params["conv2"])
    x = os_stage(x, params["conv3"])
    for bp in params["conv4"]:                                      # 2x SCBottleneck
        x = sc_bottleneck(x, bp)
    x = conv2d(x, params["conv5"], act="relu")                      # Conv1x1
    f = global_avgpool(x)                                           # AdaptiveAvgPool2d(1)
    # fc: Linear + BatchNorm1d(eval) + ReLU fused into one Pallas matmul (BN folded)
    f = matmul_fused(f.reshape(f.shape[0], -1), params["fc_w"],
                     bias=params["fc_b"], act="relu")
    # not self.training -> return the feature vector (classifier only used in training)
    # TODO(synk): training-mode path (batch-stat BatchNorm + classifier logits) not implemented.
    return f.astype(jnp.float32)


# ----------------------------- main -----------------------------

if __name__ == "__main__":
    NUM_CLASSES = 10
    CHANNELS = [16, 64, 64, 128]    # len == len(blocks) + 1, blocks = 3x OSBlock, layers = [1,1,1]
    LAYERS = [1, 1, 1]
    FEATURE_DIM = 128

    x = jax.random.normal(jax.random.PRNGKey(0), (2, 3, 64, 64), jnp.float32)  # NCHW input

    rng = PRNG(0)
    params = make_scosnet_params(rng, NUM_CLASSES, CHANNELS, LAYERS, FEATURE_DIM)

    f = scosnet_forward(params, x)
    f = jax.block_until_ready(f)

    assert f.shape == (2, FEATURE_DIM), f.shape
    assert bool(jnp.all(jnp.isfinite(f)))
    print("KERNEL_OK")
</pallas_src>

<mosaic_0001>
module attributes {stable_mosaic.version = 11 : i64} {
  func.func @_mm_body(%arg0: i32, %arg1: memref<512x147xbf16, #tpu.memory_space<vmem>>, %arg2: memref<147x16xbf16, #tpu.memory_space<vmem>>, %arg3: memref<512x16xbf16, #tpu.memory_space<vmem>>) attributes {dimension_semantics = [#tpu.dimension_semantics<parallel>], iteration_bounds = array<i64: 4>, scalar_prefetch = 0 : i64, scratch_operands = 0 : i64, tpu.core_type = #tpu.core_type<tc>, window_params = [{transform_indices = @transform_0, window_bounds = array<i64: 512, 147>}, {pipeline_mode = #tpu.pipeline_mode<synchronous>, transform_indices = @transform_1, window_bounds = array<i64: 147, 16>}, {transform_indices = @transform_2, window_bounds = array<i64: 512, 16>}]} {
    %c0 = arith.constant 0 : index
    %c0_0 = arith.constant 0 : index
    %0 = vector.load %arg1[%c0, %c0_0] : memref<512x147xbf16, #tpu.memory_space<vmem>>, vector<512x147xbf16>
    %c0_1 = arith.constant 0 : index
    %c0_2 = arith.constant 0 : index
    %1 = vector.load %arg2[%c0_1, %c0_2] : memref<147x16xbf16, #tpu.memory_space<vmem>>, vector<147x16xbf16>
    %cst = arith.constant dense<0.000000e+00> : vector<512x16xf32>
    %2 = tpu.matmul %0, %1, %cst {dimension_numbers = #tpu.dot_dimension_numbers<[1], [0], [0], [1], [0, 0, 1, 1], [], []>} : vector<512x147xbf16>, vector<147x16xbf16>, vector<512x16xf32> -> vector<512x16xf32>
    %cst_3 = arith.constant 0.000000e+00 : f32
    %3 = vector.broadcast %cst_3 : f32 to vector<512x16xf32>
    %4 = arith.maximumf %2, %3 : vector<512x16xf32>
    %5 = arith.truncf %4 : vector<512x16xf32> to vector<512x16xbf16>
    %c0_4 = arith.constant 0 : index
    %c0_5 = arith.constant 0 : index
    %6 = vector.load %arg3[%c0_4, %c0_5] : memref<512x16xbf16, #tpu.memory_space<vmem>>, vector<512x16xbf16>
    tpu.vector_store %arg3[%c0_4, %c0_5], %5 {strides = array<i32>} : memref<512x16xbf16, #tpu.memory_space<vmem>>, vector<512x16xbf16>,
    return
  }
  func.func @transform_0(%arg0: i32) -> (i32, i32) {
    %c0_i32 = arith.constant 0 : i32
    %c0_i32_0 = arith.constant 0 : i32
    return %arg0, %c0_i32 : i32, i32
  }
  func.func @transform_1(%arg0: i32) -> (i32, i32) {
    %c0_i32 = arith.constant 0 : i32
    %c0_i32_0 = arith.constant 0 : i32
    %c0_i32_1 = arith.constant 0 : i32
    return %c0_i32, %c0_i32_0 : i32, i32
  }
  func.func @transform_2(%arg0: i32) -> (i32, i32) {
    %c0_i32 = arith.constant 0 : i32
    %c0_i32_0 = arith.constant 0 : i32
    return %arg0, %c0_i32 : i32, i32
  }
}

</mosaic_0001>

<llo_original>
// kernel: tpu_custom_call.1
$region0: #{tpu_custom_call.1}
  #allocation0 [shape = 'u32[]', space=smem, size = 0x4, offset = 0x4, fixed_abs, tag = 'smem constant byte address 0x4 - core index']
  #allocation1 [shape = 'u32[144,128]{1,0:T(1,128)}', space=vmem, size = 0x12000, scoped, tag = 'internal scratch']
  %s0 = inlined_call_operand.vmem [shape: bf16[2048,147], index: 0, kind: input, shape index: {}]
  %s1 = inlined_call_operand.vmem [shape: bf16[147,16], index: 1, kind: input, shape index: {}]
  %s2 = inlined_call_operand.vmem [shape: bf16[2048,16], index: 2, kind: output, shape index: {}]
  %s3 = sld [smem:[#allocation0]]
  $region41: #{tpu_custom_call.1} parent=0
    _
  %s5 = ssub.s32 1, %s3
  %s6 = scalar_select 0, %s5, %s3
  loop: start=0, step=1, limit=6
  $region2: #{tpu_custom_call.1} parent=0 // loop_pre_header
    _
  $region3: #{tpu_custom_call.1} parent=0 // loop_header
    %s8 = sphi 0, %s12
    %p9 = scmp.ge.s32.totalorder %s8, 6
    %s18 = sphi 0, %s20
    %s21 = sphi 0, %s18
    %s22 = sphi 0, %s21
    %s38 = sphi 0, %s22
    %s42 = sphi 0, %s42
    %s44 = sphi 0, %s42
    %s45 = sphi 0, %s44
    %s59 = sphi 0, %s45
    %s65 = sphi 0, %s67
    %s68 = sphi 0, %s65
    %s69 = sphi 0, %s68
    %s85 = sphi 0, %s69
  $region4: #{tpu_custom_call.1} parent=0 // loop_header_branch
    %11 = sbr.rel (%p9) target = $region8
  $region5: #{tpu_custom_call.1} parent=0 // loop_body
    %s13 = ssub.s32 %s8, 1
    %s14 = ssub.s32 %s8, 2
    %s15 = sadd.s32 %s8, 1
    %s16 = ssub.s32 %s8, %s15
    %p17 = scmp.eq.s32.totalorder %s16, 0
    %s19 = sadd.s32 %s18, 1
    %s20 = scalar_select %p17, %s18, %s19
    %p23 = pneg %p17
    %p24 = scmp.eq.s32.totalorder %s8, 3
    %p25 = por %p23, %p24
    %p26 = scmp.ne.s32.totalorder %s18, %s21
    %p27 = scmp.eq.s32.totalorder %s8, 0
    %p28 = por %p26, %p27
    %p29 = scmp.ne.s32.totalorder %s18, %s21
    %p30 = scmp.eq.s32.totalorder %s13, 3
    %p31 = por %p29, %p30
    %p32 = scmp.ne.s32.totalorder %s21, %s22
    %p33 = scmp.eq.s32.totalorder %s13, 0
    %p34 = por %p32, %p33
    %p35 = scmp.ne.s32.totalorder %s21, %s22
    %p36 = scmp.eq.s32.totalorder %s14, 3
    %p37 = por %p35, %p36
    %p39 = scmp.ne.s32.totalorder %s22, %s38
    %p40 = scmp.eq.s32.totalorder %s14, 0
    %p41 = por %p39, %p40
    %s43 = sadd.s32 %s42, 1
    %p46 = scmp.eq.s32.totalorder %s8, 3
    %p47 = scmp.ne.s32.totalorder %s42, %s44
    %p48 = scmp.eq.s32.totalorder %s8, 0
    %p49 = por %p47, %p48
    %p50 = scmp.ne.s32.totalorder %s42, %s44
    %p51 = scmp.eq.s32.totalorder %s13, 3
    %p52 = por %p50, %p51
    %p53 = scmp.ne.s32.totalorder %s44, %s45
    %p54 = scmp.eq.s32.totalorder %s13, 0
    %p55 = por %p53, %p54
    %p56 = scmp.ne.s32.totalorder %s44, %s45
    %p57 = scmp.eq.s32.totalorder %s14, 3
    %p58 = por %p56, %p57
    %p60 = scmp.ne.s32.totalorder %s45, %s59
    %p61 = scmp.eq.s32.totalorder %s14, 0
    %p62 = por %p60, %p61
    %s63 = ssub.s32 %s8, %s15
    %p64 = scmp.eq.s32.totalorder %s63, 0
    %s66 = sadd.s32 %s65, 1
    %s67 = scalar_select %p64, %s65, %s66
    %p70 = pneg %p64
    %p71 = scmp.eq.s32.totalorder %s8, 3
    %p72 = por %p70, %p71
    %p73 = scmp.ne.s32.totalorder %s65, %s68
    %p74 = scmp.eq.s32.totalorder %s8, 0
    %p75 = por %p73, %p74
    %p76 = scmp.ne.s32.totalorder %s65, %s68
    %p77 = scmp.eq.s32.totalorder %s13, 3
    %p78 = por %p76, %p77
    %p79 = scmp.ne.s32.totalorder %s68, %s69
    %p80 = scmp.eq.s32.totalorder %s13, 0
    %p81 = por %p79, %p80
    %p82 = scmp.ne.s32.totalorder %s68, %s69
    %p83 = scmp.eq.s32.totalorder %s14, 3
    %p84 = por %p82, %p83
    %p86 = scmp.ne.s32.totalorder %s69, %s85
    %p87 = scmp.eq.s32.totalorder %s14, 0
    %p88 = por %p86, %p87
    %p89 = scmp.le.s32.totalorder 1, %s8
    %p90 = scmp.lt.s32.totalorder %s8, 5
    %p91 = pnand %p89, %p90
    %p92 = pneg %p91
    // Predicated region
    $region9: #{tpu_custom_call.1} parent=5 // pred_check
      _
    $region10: #{tpu_custom_call.1} parent=5 // pred_check_branch
      %94 = sbr.rel (%p91) target = $region12
    $region11: #{tpu_custom_call.1} parent=5 // pred_region
      %s95 = ssub.s32 %s8, 1
      // Predicated region
      $region13: #{tpu_custom_call.1} parent=11 // pred_check
        %p96 = pneg %p55
      $region14: #{tpu_custom_call.1} parent=11 // pred_check_branch
        %98 = sbr.rel (%p96) target = $region16
      $region15: #{tpu_custom_call.1} parent=11 // pred_region
        _
      $region16: #{tpu_custom_call.1} parent=11 // pred_fallthru
        _
    $region12: #{tpu_custom_call.1} parent=5 // pred_fallthru
      _
    %p99 = scmp.lt.s32.totalorder %s8, 4
    // Predicated region
    $region17: #{tpu_custom_call.1} parent=5 // pred_check
      %p100 = pneg %p99
    $region18: #{tpu_custom_call.1} parent=5 // pred_check_branch
      %102 = sbr.rel (%p100) target = $region20
    $region19: #{tpu_custom_call.1} parent=5 // pred_region
      // Predicated region
      $region21: #{tpu_custom_call.1} parent=19 // pred_check
        %p103 = pneg %p28
      $region22: #{tpu_custom_call.1} parent=19 // pred_check_branch
        %105 = sbr.rel (%p103) target = $region24
      $region23: #{tpu_custom_call.1} parent=19 // pred_region
        %s106 = smul.u32 64, %s8
        %p107 = scmp.lt.s32.totalorder %s106, 255
        %s108 = scalar_select %p107, %s106, 255
        %s109 = smul.addr %s108, 2
        %s110 = smul.addr %s109, 4
        %s111 = scalar_lea.vmem %s0, %s110
        %s112 = smul.u32 64, %s8
      $region24: #{tpu_custom_call.1} parent=19 // pred_fallthru
        _
    $region20: #{tpu_custom_call.1} parent=5 // pred_fallthru
      _
    %p113 = scmp.le.s32.totalorder 1, %s8
    %p114 = scmp.lt.s32.totalorder %s8, 5
    %p115 = pnand %p113, %p114
    %p116 = pneg %p115
    // Predicated region
    $region25: #{tpu_custom_call.1} parent=5 // pred_check
      _
    $region26: #{tpu_custom_call.1} parent=5 // pred_check_branch
      %118 = sbr.rel (%p115) target = $region28
    $region27: #{tpu_custom_call.1} parent=5 // pred_region
      %s119 = ssub.s32 %s8, 1
      %s120 = smul.u32 64, %s13
      %p121 = scmp.lt.s32.totalorder %s120, 255
      %s122 = scalar_select %p121, %s120, 255
      %s123 = smul.addr %s122, 2
      %s124 = smul.addr %s123, 4
      %s125 = scalar_lea.vmem %s0, %s124
      %p126 = pneg %p34
      %p127 = pneg %p31
      %p128 = pneg %p55
      %p129 = pneg %p52
      %p130 = pneg %p81
      %p131 = pneg %p78
      %s132 = smul.u32 64, %s13
      %p133 = scmp.lt.s32.totalorder %s132, 255
      %s134 = scalar_select %p133, %s132, 255
      %s135 = smul.addr %s134, 4
      %s136 = scalar_lea.vmem %s2, %s135
      %s137 = smul.u32 64, %s13
      %p138 = scmp.lt.s32.totalorder %s137, 255
      %s139 = scalar_select %p138, %s137, 255
      %s140 = smul.addr %s139, 2
      %s141 = smul.addr %s140, 4
      %s142 = scalar_lea.vmem %s0, %s141
      %s143 = smul.u32 64, %s13
      %s144 = smul.u32 64, %s13
      %p145 = scmp.lt.s32.totalorder %s144, 255
      %s146 = scalar_select %p145, %s144, 255
      %s147 = smul.addr %s146, 4
      %s148 = scalar_lea.vmem %s2, %s147
      %s149 = smul.u32 64, %s13
      %v151 = vld [vmem:[%s142] sm:$0xff]
      %v152 = vld [vmem:[%s142 + $0x8] sm:$0xff]
      %v153 = vld [vmem:[%s142 + $0x10] sm:$0xff]
      %v154 = vld [vmem:[%s142 + $0x18] sm:$0xff]
      %v155 = vld [vmem:[%s142 + $0x20] sm:$0xff]
      %v156 = vld [vmem:[%s142 + $0x28] sm:$0xff]
      %v157 = vld [vmem:[%s142 + $0x30] sm:$0xff]
      %v158 = vld [vmem:[%s142 + $0x38] sm:$0xff]
      %v159 = vld [vmem:[%s142 + $0x40] sm:$0xff]
      %v160 = vld [vmem:[%s142 + $0x48] sm:$0xff]
      %v161 = vld [vmem:[%s142 + $0x50] sm:$0xff]
      %v162 = vld [vmem:[%s142 + $0x58] sm:$0xff]
      %v163 = vld [vmem:[%s142 + $0x60] sm:$0xff]
      %v164 = vld [vmem:[%s142 + $0x68] sm:$0xff]
      %v165 = vld [vmem:[%s142 + $0x70] sm:$0xff]
      %v166 = vld [vmem:[%s142 + $0x78] sm:$0xff]
      %v167 = vld [vmem:[%s142 + $0x80] sm:$0xff]
      %v168 = vld [vmem:[%s142 + $0x88] sm:$0xff]
      %v169 = vld [vmem:[%s142 + $0x90] sm:$0xff]
      %v170 = vld [vmem:[%s142 + $0x98] sm:$0xff]
      %v171 = vld [vmem:[%s142 + $0xa0] sm:$0xff]
      %v172 = vld [vmem:[%s142 + $0xa8] sm:$0xff]
      %v173 = vld [vmem:[%s142 + $0xb0] sm:$0xff]
      %v174 = vld [vmem:[%s142 + $0xb8] sm:$0xff]
      %v175 = vld [vmem:[%s142 + $0xc0] sm:$0xff]
      %v176 = vld [vmem:[%s142 + $0xc8] sm:$0xff]
      %v177 = vld [vmem:[%s142 + $0xd0] sm:$0xff]
      %v178 = vld [vmem:[%s142 + $0xd8] sm:$0xff]
      %v179 = vld [vmem:[%s142 + $0xe0] sm:$0xff]
      %v180 = vld [vmem:[%s142 + $0xe8] sm:$0xff]
      %v181 = vld [vmem:[%s142 + $0xf0] sm:$0xff]
      %v182 = vld [vmem:[%s142 + $0xf8] sm:$0xff]
      %v183 = vld [vmem:[%s142 + $0x100] sm:$0xff]
      %v184 = vld [vmem:[%s142 + $0x108] sm:$0xff]
      %v185 = vld [vmem:[%s142 + $0x110] sm:$0xff]
      %v186 = vld [vmem:[%s142 + $0x118] sm:$0xff]
      %v187 = vld [vmem:[%s142 + $0x120] sm:$0xff]
      %v188 = vld [vmem:[%s142 + $0x128] sm:$0xff]
      %v189 = vld [vmem:[%s142 + $0x130] sm:$0xff]
      %v190 = vld [vmem:[%s142 + $0x138] sm:$0xff]
      %v191 = vld [vmem:[%s142 + $0x140] sm:$0xff]
      %v192 = vld [vmem:[%s142 + $0x148] sm:$0xff]
      %v193 = vld [vmem:[%s142 + $0x150] sm:$0xff]
      %v194 = vld [vmem:[%s142 + $0x158] sm:$0xff]
      %v195 = vld [vmem:[%s142 + $0x160] sm:$0xff]
      %v196 = vld [vmem:[%s142 + $0x168] sm:$0xff]
      %v197 = vld [vmem:[%s142 + $0x170] sm:$0xff]
      %v198 = vld [vmem:[%s142 + $0x178] sm:$0xff]
      %v199 = vld [vmem:[%s142 + $0x180] sm:$0xff]
      %v200 = vld [vmem:[%s142 + $0x188] sm:$0xff]
      %v201 = vld [vmem:[%s142 + $0x190] sm:$0xff]
      %v202 = vld [vmem:[%s142 + $0x198] sm:$0xff]
      %v203 = vld [vmem:[%s142 + $0x1a0] sm:$0xff]
      %v204 = vld [vmem:[%s142 + $0x1a8] sm:$0xff]
      %v205 = vld [vmem:[%s142 + $0x1b0] sm:$0xff]
      %v206 = vld [vmem:[%s142 + $0x1b8] sm:$0xff]
      %v207 = vld [vmem:[%s142 + $0x1c0] sm:$0xff]
      %v208 = vld [vmem:[%s142 + $0x1c8] sm:$0xff]
      %v209 = vld [vmem:[%s142 + $0x1d0] sm:$0xff]
      %v210 = vld [vmem:[%s142 + $0x1d8] sm:$0xff]
      %v211 = vld [vmem:[%s142 + $0x1e0] sm:$0xff]
      %v212 = vld [vmem:[%s142 + $0x1e8] sm:$0xff]
      %v213 = vld [vmem:[%s142 + $0x1f0] sm:$0xff]
      %v214 = vld [vmem:[%s142 + $0x1f8] sm:$0xff]
      %v215 = vld [vmem:[%s1] sm:$0xf]
      %v216 = vld [vmem:[%s1 + $0x4] sm:$0xf]
      %v217 = vld [vmem:[%s1 + $0x8] sm:$0xf]
      %v218 = vld [vmem:[%s1 + $0xc] sm:$0xf]
      %v219 = vld [vmem:[%s1 + $0x10] sm:$0xf]
      %v220 = vld [vmem:[%s1 + $0x14] sm:$0xf]
      %v221 = vld [vmem:[%s1 + $0x18] sm:$0xf]
      %v222 = vld [vmem:[%s1 + $0x1c] sm:$0xf]
      %v223 = vld [vmem:[%s1 + $0x20] sm:$0xf]
      %v224 = vld [vmem:[%s1 + $0x24] sm:$0xf]
      %v225 = vld [vmem:[%s1 + $0x28] sm:$0xf]
      %v226 = vld [vmem:[%s1 + $0x2c] sm:$0xf]
      %v227 = vld [vmem:[%s1 + $0x30] sm:$0xf]
      %v228 = vld [vmem:[%s1 + $0x34] sm:$0xf]
      %v229 = vld [vmem:[%s1 + $0x38] sm:$0xf]
      %v230 = vld [vmem:[%s1 + $0x3c] sm:$0xf]
      %v231 = vld [vmem:[%s1 + $0x40] sm:$0xf]
      %v232 = vld [vmem:[%s1 + $0x44] sm:$0xf]
      %v233 = vld [vmem:[%s1 + $0x48] sm:$0x3]
      %v298 = vunpack.c.l.b16 %v151
      %v299 = vunpack.c.h.b16 %v151
      %v300 = vunpack.c.l.b16 %v152
      %v301 = vunpack.c.h.b16 %v152
      %v302 = vunpack.c.l.b16 %v153
      %v303 = vunpack.c.h.b16 %v153
      %v304 = vunpack.c.l.b16 %v154
      %v305 = vunpack.c.h.b16 %v154
      %v306 = vunpack.c.l.b16 %v155
      %v307 = vunpack.c.h.b16 %v155
      %v308 = vunpack.c.l.b16 %v156
      %v309 = vunpack.c.h.b16 %v156
      %v310 = vunpack.c.l.b16 %v157
      %v311 = vunpack.c.h.b16 %v157
      %v312 = vunpack.c.l.b16 %v158
      %v313 = vunpack.c.h.b16 %v158
      %v314 = vunpack.c.l.b16 %v159
      %v315 = vunpack.c.h.b16 %v159
      %v316 = vunpack.c.l.b16 %v160
      %v317 = vunpack.c.h.b16 %v160
      %v318 = vunpack.c.l.b16 %v161
      %v319 = vunpack.c.h.b16 %v161
      %v320 = vunpack.c.l.b16 %v162
      %v321 = vunpack.c.h.b16 %v162
      %v322 = vunpack.c.l.b16 %v163
      %v323 = vunpack.c.h.b16 %v163
      %v324 = vunpack.c.l.b16 %v164
      %v325 = vunpack.c.h.b16 %v164
      %v326 = vunpack.c.l.b16 %v165
      %v327 = vunpack.c.h.b16 %v165
      %v328 = vunpack.c.l.b16 %v166
      %v329 = vunpack.c.h.b16 %v166
      %v330 = vunpack.c.l.b16 %v167
      %v331 = vunpack.c.h.b16 %v167
      %v332 = vunpack.c.l.b16 %v168
      %v333 = vunpack.c.h.b16 %v168
      %v334 = vunpack.c.l.b16 %v169
      %v335 = vunpack.c.h.b16 %v169
      %v336 = vunpack.c.l.b16 %v170
      %v337 = vunpack.c.h.b16 %v170
      %v338 = vunpack.c.l.b16 %v171
      %v339 = vunpack.c.h.b16 %v171
      %v340 = vunpack.c.l.b16 %v172
      %v341 = vunpack.c.h.b16 %v172
      %v342 = vunpack.c.l.b16 %v173
      %v343 = vunpack.c.h.b16 %v173
      %v344 = vunpack.c.l.b16 %v174
      %v345 = vunpack.c.h.b16 %v174
      %v346 = vunpack.c.l.b16 %v175
      %v347 = vunpack.c.h.b16 %v175
      %v348 = vunpack.c.l.b16 %v176
      %v349 = vunpack.c.h.b16 %v176
      %v350 = vunpack.c.l.b16 %v177
      %v351 = vunpack.c.h.b16 %v177
      %v352 = vunpack.c.l.b16 %v178
      %v353 = vunpack.c.h.b16 %v178
      %v354 = vunpack.c.l.b16 %v179
      %v355 = vunpack.c.h.b16 %v179
      %v356 = vunpack.c.l.b16 %v180
      %v357 = vunpack.c.h.b16 %v180
      %v358 = vunpack.c.l.b16 %v181
      %v359 = vunpack.c.h.b16 %v181
      %v360 = vunpack.c.l.b16 %v182
      %v361 = vunpack.c.h.b16 %v182
      %v362 = vunpack.c.l.b16 %v183
      %v363 = vunpack.c.h.b16 %v183
      %v364 = vunpack.c.l.b16 %v184
      %v365 = vunpack.c.h.b16 %v184
      %v366 = vunpack.c.l.b16 %v185
      %v367 = vunpack.c.h.b16 %v185
      %v368 = vunpack.c.l.b16 %v186
      %v369 = vunpack.c.h.b16 %v186
      %v370 = vunpack.c.l.b16 %v187
      %v371 = vunpack.c.h.b16 %v187
      %v372 = vunpack.c.l.b16 %v188
      %v373 = vunpack.c.h.b16 %v188
      %v374 = vunpack.c.l.b16 %v189
      %v375 = vunpack.c.h.b16 %v189
      %v376 = vunpack.c.l.b16 %v190
      %v377 = vunpack.c.h.b16 %v190
      %v378 = vunpack.c.l.b16 %v191
      %v379 = vunpack.c.h.b16 %v191
      %v380 = vunpack.c.l.b16 %v192
      %v381 = vunpack.c.h.b16 %v192
      %v382 = vunpack.c.l.b16 %v193
      %v383 = vunpack.c.h.b16 %v193
      %v384 = vunpack.c.l.b16 %v194
      %v385 = vunpack.c.h.b16 %v194
      %v386 = vunpack.c.l.b16 %v195
      %v387 = vunpack.c.h.b16 %v195
      %v388 = vunpack.c.l.b16 %v196
      %v389 = vunpack.c.h.b16 %v196
      %v390 = vunpack.c.l.b16 %v197
      %v391 = vunpack.c.h.b16 %v197
      %v392 = vunpack.c.l.b16 %v198
      %v393 = vunpack.c.h.b16 %v198
      %v394 = vunpack.c.l.b16 %v199
      %v395 = vunpack.c.h.b16 %v199
      %v396 = vunpack.c.l.b16 %v200
      %v397 = vunpack.c.h.b16 %v200
      %v398 = vunpack.c.l.b16 %v201
      %v399 = vunpack.c.h.b16 %v201
      %v400 = vunpack.c.l.b16 %v202
      %v401 = vunpack.c.h.b16 %v202
      %v402 = vunpack.c.l.b16 %v203
      %v403 = vunpack.c.h.b16 %v203
      %v404 = vunpack.c.l.b16 %v204
      %v405 = vunpack.c.h.b16 %v204
      %v406 = vunpack.c.l.b16 %v205
      %v407 = vunpack.c.h.b16 %v205
      %v408 = vunpack.c.l.b16 %v206
      %v409 = vunpack.c.h.b16 %v206
      %v410 = vunpack.c.l.b16 %v207
      %v411 = vunpack.c.h.b16 %v207
      %v412 = vunpack.c.l.b16 %v208
      %v413 = vunpack.c.h.b16 %v208
      %v414 = vunpack.c.l.b16 %v209
      %v415 = vunpack.c.h.b16 %v209
      %v416 = vunpack.c.l.b16 %v210
      %v417 = vunpack.c.h.b16 %v210
      %v418 = vunpack.c.l.b16 %v211
      %v419 = vunpack.c.h.b16 %v211
      %v420 = vunpack.c.l.b16 %v212
      %v421 = vunpack.c.h.b16 %v212
      %v422 = vunpack.c.l.b16 %v213
      %v423 = vunpack.c.h.b16 %v213
      %v424 = vunpack.c.l.b16 %v214
      %v425 = vunpack.c.h.b16 %v214
      %v426 = vpack.c.b16 %v300, %v298
      %v427 = vpack.c.b16 %v301, %v299
      %v428 = vpack.c.b16 %v304, %v302
      %v429 = vpack.c.b16 %v305, %v303
      %v430 = vpack.c.b16 %v308, %v306
      %v431 = vpack.c.b16 %v309, %v307
      %v432 = vpack.c.b16 %v312, %v310
      %v433 = vpack.c.b16 %v313, %v311
      %v434 = vpack.c.b16 %v316, %v314
      %v435 = vpack.c.b16 %v317, %v315
      %v436 = vpack.c.b16 %v320, %v318
      %v437 = vpack.c.b16 %v321, %v319
      %v438 = vpack.c.b16 %v324, %v322
      %v439 = vpack.c.b16 %v325, %v323
      %v440 = vpack.c.b16 %v328, %v326
      %v441 = vpack.c.b16 %v329, %v327
      %v442 = vpack.c.b16 %v332, %v330
      %v443 = vpack.c.b16 %v333, %v331
      %v444 = vpack.c.b16 %v336, %v334
      %v445 = vpack.c.b16 %v337, %v335
      %v446 = vpack.c.b16 %v340, %v338
      %v447 = vpack.c.b16 %v341, %v339
      %v448 = vpack.c.b16 %v344, %v342
      %v449 = vpack.c.b16 %v345, %v343
      %v450 = vpack.c.b16 %v348, %v346
      %v451 = vpack.c.b16 %v349, %v347
      %v452 = vpack.c.b16 %v352, %v350
      %v453 = vpack.c.b16 %v353, %v351
      %v454 = vpack.c.b16 %v356, %v354
      %v455 = vpack.c.b16 %v357, %v355
      %v456 = vpack.c.b16 %v360, %v358
      %v457 = vpack.c.b16 %v361, %v359
      %v458 = vpack.c.b16 %v364, %v362
      %v459 = vpack.c.b16 %v365, %v363
      %v460 = vpack.c.b16 %v368, %v366
      %v461 = vpack.c.b16 %v369, %v367
      %v462 = vpack.c.b16 %v372, %v370
      %v463 = vpack.c.b16 %v373, %v371
      %v464 = vpack.c.b16 %v376, %v374
      %v465 = vpack.c.b16 %v377, %v375
      %v466 = vpack.c.b16 %v380, %v378
      %v467 = vpack.c.b16 %v381, %v379
      %v468 = vpack.c.b16 %v384, %v382
      %v469 = vpack.c.b16 %v385, %v383
      %v470 = vpack.c.b16 %v388, %v386
      %v471 = vpack.c.b16 %v389, %v387
      %v472 = vpack.c.b16 %v392, %v390
      %v473 = vpack.c.b16 %v393, %v391
      %v474 = vpack.c.b16 %v396, %v394
      %v475 = vpack.c.b16 %v397, %v395
      %v476 = vpack.c.b16 %v400, %v398
      %v477 = vpack.c.b16 %v401, %v399
      %v478 = vpack.c.b16 %v404, %v402
      %v479 = vpack.c.b16 %v405, %v403
      %v480 = vpack.c.b16 %v408, %v406
      %v481 = vpack.c.b16 %v409, %v407
      %v482 = vpack.c.b16 %v412, %v410
      %v483 = vpack.c.b16 %v413, %v411
      %v484 = vpack.c.b16 %v416, %v414
      %v485 = vpack.c.b16 %v417, %v415
      %v486 = vpack.c.b16 %v420, %v418
      %v487 = vpack.c.b16 %v421, %v419
      %v488 = vpack.c.b16 %v424, %v422
      %v489 = vpack.c.b16 %v425, %v423
      %v541 = vunpack.c.l.b16 %v215
      %v542 = vunpack.c.l.b16 %v216
      %v543 = vunpack.c.l.b16 %v217
      %v544 = vunpack.c.l.b16 %v218
      %v545 = vunpack.c.l.b16 %v219
      %v546 = vunpack.c.l.b16 %v220
      %v547 = vunpack.c.l.b16 %v221
      %v548 = vunpack.c.l.b16 %v222
      %v549 = vunpack.c.l.b16 %v223
      %v550 = vunpack.c.l.b16 %v224
      %v551 = vunpack.c.l.b16 %v225
      %v552 = vunpack.c.l.b16 %v226
      %v553 = vunpack.c.l.b16 %v227
      %v554 = vunpack.c.l.b16 %v228
      %v555 = vunpack.c.l.b16 %v229
      %v556 = vunpack.c.l.b16 %v230
      %v557 = vunpack.c.l.b16 %v231
      %v558 = vunpack.c.l.b16 %v232
      %v559 = vunpack.c.l.b16 %v233
      %v560 = vpack.c.b16 %v542, %v541
      %v561 = vpack.c.b16 %v544, %v543
      %v562 = vpack.c.b16 %v546, %v545
      %v563 = vpack.c.b16 %v548, %v547
      %v564 = vpack.c.b16 %v550, %v549
      %v565 = vpack.c.b16 %v552, %v551
      %v566 = vpack.c.b16 %v554, %v553
      %v567 = vpack.c.b16 %v556, %v555
      %v568 = vpack.c.b16 %v558, %v557
      %v569 = vpack.c.b16 %v559, %v559
      %vm579 = vcmask 154624
      %v581 = vsel %vm579, %v427, 0
      %v584 = vsel %vm579, %v429, 0
      %v587 = vsel %vm579, %v431, 0
      %v590 = vsel %vm579, %v433, 0
      %v593 = vsel %vm579, %v435, 0
      %v596 = vsel %vm579, %v437, 0
      %v599 = vsel %vm579, %v439, 0
      %v602 = vsel %vm579, %v441, 0
      %v605 = vsel %vm579, %v443, 0
      %v608 = vsel %vm579, %v445, 0
      %v611 = vsel %vm579, %v447, 0
      %v614 = vsel %vm579, %v449, 0
      %v617 = vsel %vm579, %v451, 0
      %v620 = vsel %vm579, %v453, 0
      %v623 = vsel %vm579, %v455, 0
      %v626 = vsel %vm579, %v457, 0
      %v629 = vsel %vm579, %v459, 0
      %v632 = vsel %vm579, %v461, 0
      %v635 = vsel %vm579, %v463, 0
      %v638 = vsel %vm579, %v465, 0
      %v641 = vsel %vm579, %v467, 0
      %v644 = vsel %vm579, %v469, 0
      %v647 = vsel %vm579, %v471, 0
      %v650 = vsel %vm579, %v473, 0
      %v653 = vsel %vm579, %v475, 0
      %v656 = vsel %vm579, %v477, 0
      %v659 = vsel %vm579, %v479, 0
      %v662 = vsel %vm579, %v481, 0
      %v665 = vsel %vm579, %v483, 0
      %v668 = vsel %vm579, %v485, 0
      %v671 = vsel %vm579, %v487, 0
      %v674 = vsel %vm579, %v489, 0
      %vm676 = vcmask 1040384
      %vm677 = vcmask 1041408
      %v678 = vsel %vm676, 4294967295, 65535
      %v679 = vsel %vm677, %v678, 0
      %v681 = vand.u32 %v569, %v679
      %683 = vmatprep.subr.bf16.mxu0 0
      %684 = vmatpush1.bf16.msra.mxu0 %v567
      %685 = vmatprep.subr.bf16.mxu0 0
      %686 = vmatpush1.bf16.msra.mxu0 %v566
      %687 = vmatprep.subr.bf16.mxu0 0
      %688 = vmatpush1.bf16.msra.mxu0 %v565
      %689 = vmatprep.subr.bf16.mxu0 0
      %690 = vmatpush1.bf16.msra.mxu0 %v564
      %691 = vmatprep.subr.bf16.mxu0 0
      %692 = vmatpush1.bf16.msra.mxu0 %v563
      %693 = vmatprep.subr.bf16.mxu0 0
      %694 = vmatpush1.bf16.msra.mxu0 %v562
      %695 = vmatprep.subr.bf16.mxu0 0
      %696 = vmatpush1.bf16.msra.mxu0 %v561
      %697 = vmatprep.subr.bf16.mxu0 0
      %698 = vmatpush1.bf16.msra.mxu0 %v560
      %699 = vmatprep.subr.bf16.mxu0 0
      %700 = vmatpush2.bf16.msra.mxu0 0
      %701 = vmatprep.subr.bf16.mxu0 0
      %702 = vmatpush2.bf16.msra.mxu0 0
      %703 = vmatprep.subr.bf16.mxu0 0
      %704 = vmatpush2.bf16.msra.mxu0 0
      %705 = vmatprep.subr.bf16.mxu0 0
      %706 = vmatpush2.bf16.msra.mxu0 0
      %707 = vmatprep.subr.bf16.mxu0 0
      %708 = vmatpush2.bf16.msra.mxu0 0
      %709 = vmatprep.subr.bf16.mxu0 0
      %710 = vmatpush2.bf16.msra.mxu0 0
      %711 = vmatprep.subr.bf16.mxu0 0
      %712 = vmatpush2.bf16.msra.mxu0 %v681
      %713 = vmatprep.subr.bf16.mxu0 0
      %714 = vmatpush2.bf16.msra.mxu0 %v568
      %715 = vmatprep.mubr.bf16.mxu0 %v581
      %716 = vmatmul.mubr.bf16.gmra.mxu0 %v426
      %v717 = vpop.f32.mrf.mxu0
      %v718 = vadd.f32 0.0, %v717
      %v719 = vpop.f32.mrf.mxu0
      %v720 = vpop.f32.mrf.mxu0
      %v721 = vadd.f32 0.0, %v720
      %v722 = vpop.f32.mrf.mxu0
      %723 = vmatprep.mubr.bf16.mxu0 %v584
      %724 = vmatmul.mubr.bf16.gmra.mxu0 %v428
      %v725 = vpop.f32.mrf.mxu0
      %v726 = vadd.f32 0.0, %v725
      %v727 = vpop.f32.mrf.mxu0
      %v728 = vpop.f32.mrf.mxu0
      %v729 = vadd.f32 0.0, %v728
      %v730 = vpop.f32.mrf.mxu0
      %731 = vmatprep.mubr.bf16.mxu0 %v587
      %732 = vmatmul.mubr.bf16.gmra.mxu0 %v430
      %v733 = vpop.f32.mrf.mxu0
      %v734 = vadd.f32 0.0, %v733
      %v735 = vpop.f32.mrf.mxu0
      %v736 = vpop.f32.mrf.mxu0
      %v737 = vadd.f32 0.0, %v736
      %v738 = vpop.f32.mrf.mxu0
      %739 = vmatprep.mubr.bf16.mxu0 %v590
      %740 = vmatmul.mubr.bf16.gmra.mxu0 %v432
      %v741 = vpop.f32.mrf.mxu0
      %v742 = vadd.f32 0.0, %v741
      %v743 = vpop.f32.mrf.mxu0
      %v744 = vpop.f32.mrf.mxu0
      %v745 = vadd.f32 0.0, %v744
      %v746 = vpop.f32.mrf.mxu0
      %747 = vmatprep.mubr.bf16.mxu0 %v593
      %748 = vmatmul.mubr.bf16.gmra.mxu0 %v434
      %v749 = vpop.f32.mrf.mxu0
      %v750 = vadd.f32 0.0, %v749
      %v751 = vpop.f32.mrf.mxu0
      %v752 = vpop.f32.mrf.mxu0
      %v753 = vadd.f32 0.0, %v752
      %v754 = vpop.f32.mrf.mxu0
      %755 = vmatprep.mubr.bf16.mxu0 %v596
      %756 = vmatmul.mubr.bf16.gmra.mxu0 %v436
      %v757 = vpop.f32.mrf.mxu0
      %v758 = vadd.f32 0.0, %v757
      %v759 = vpop.f32.mrf.mxu0
      %v760 = vpop.f32.mrf.mxu0
      %v761 = vadd.f32 0.0, %v760
      %v762 = vpop.f32.mrf.mxu0
      %763 = vmatprep.mubr.bf16.mxu0 %v599
      %764 = vmatmul.mubr.bf16.gmra.mxu0 %v438
      %v765 = vpop.f32.mrf.mxu0
      %v766 = vadd.f32 0.0, %v765
      %v767 = vpop.f32.mrf.mxu0
      %v768 = vpop.f32.mrf.mxu0
      %v769 = vadd.f32 0.0, %v768
      %v770 = vpop.f32.mrf.mxu0
      %771 = vmatprep.mubr.bf16.mxu0 %v602
      %772 = vmatmul.mubr.bf16.gmra.mxu0 %v440
      %v773 = vpop.f32.mrf.mxu0
      %v774 = vadd.f32 0.0, %v773
      %v775 = vpop.f32.mrf.mxu0
      %v776 = vpop.f32.mrf.mxu0
      %v777 = vadd.f32 0.0, %v776
      %v778 = vpop.f32.mrf.mxu0
      %779 = vmatprep.mubr.bf16.mxu0 %v605
      %780 = vmatmul.mubr.bf16.gmra.mxu0 %v442
      %v781 = vpop.f32.mrf.mxu0
      %v782 = vadd.f32 0.0, %v781
      %v783 = vpop.f32.mrf.mxu0
      %v784 = vpop.f32.mrf.mxu0
      %v785 = vadd.f32 0.0, %v784
      %v786 = vpop.f32.mrf.mxu0
      %787 = vmatprep.mubr.bf16.mxu0 %v608
      %788 = vmatmul.mubr.bf16.gmra.mxu0 %v444
      %v789 = vpop.f32.mrf.mxu0
      %v790 = vadd.f32 0.0, %v789
      %v791 = vpop.f32.mrf.mxu0
      %v792 = vpop.f32.mrf.mxu0
      %v793 = vadd.f32 0.0, %v792
      %v794 = vpop.f32.mrf.mxu0
      %795 = vmatprep.mubr.bf16.mxu0 %v611
      %796 = vmatmul.mubr.bf16.gmra.mxu0 %v446
      %v797 = vpop.f32.mrf.mxu0
      %v798 = vadd.f32 0.0, %v797
      %v799 = vpop.f32.mrf.mxu0
      %v800 = vpop.f32.mrf.mxu0
      %v801 = vadd.f32 0.0, %v800
      %v802 = vpop.f32.mrf.mxu0
      %803 = vmatprep.mubr.bf16.mxu0 %v614
      %804 = vmatmul.mubr.bf16.gmra.mxu0 %v448
      %v805 = vpop.f32.mrf.mxu0
      %v806 = vadd.f32 0.0, %v805
      %v807 = vpop.f32.mrf.mxu0
      %v808 = vpop.f32.mrf.mxu0
      %v809 = vadd.f32 0.0, %v808
      %v810 = vpop.f32.mrf.mxu0
      %811 = vmatprep.mubr.bf16.mxu0 %v617
      %812 = vmatmul.mubr.bf16.gmra.mxu0 %v450
      %v813 = vpop.f32.mrf.mxu0
      %v814 = vadd.f32 0.0, %v813
      %v815 = vpop.f32.mrf.mxu0
      %v816 = vpop.f32.mrf.mxu0
      %v817 = vadd.f32 0.0, %v816
      %v818 = vpop.f32.mrf.mxu0
      %819 = vmatprep.mubr.bf16.mxu0 %v620
      %820 = vmatmul.mubr.bf16.gmra.mxu0 %v452
      %v821 = vpop.f32.mrf.mxu0
      %v822 = vadd.f32 0.0, %v821
      %v823 = vpop.f32.mrf.mxu0
      %v824 = vpop.f32.mrf.mxu0
      %v825 = vadd.f32 0.0, %v824
      %v826 = vpop.f32.mrf.mxu0
      %827 = vmatprep.mubr.bf16.mxu0 %v623
      %828 = vmatmul.mubr.bf16.gmra.mxu0 %v454
      %v829 = vpop.f32.mrf.mxu0
      %v830 = vadd.f32 0.0, %v829
      %v831 = vpop.f32.mrf.mxu0
      %v832 = vpop.f32.mrf.mxu0
      %v833 = vadd.f32 0.0, %v832
      %v834 = vpop.f32.mrf.mxu0
      %835 = vmatprep.mubr.bf16.mxu0 %v626
      %836 = vmatmul.mubr.bf16.gmra.mxu0 %v456
      %v837 = vpop.f32.mrf.mxu0
      %v838 = vadd.f32 0.0, %v837
      %v839 = vpop.f32.mrf.mxu0
      %v840 = vpop.f32.mrf.mxu0
      %v841 = vadd.f32 0.0, %v840
      %v842 = vpop.f32.mrf.mxu0
      %843 = vmatprep.mubr.bf16.mxu0 %v629
      %844 = vmatmul.mubr.bf16.gmra.mxu0 %v458
      %v845 = vpop.f32.mrf.mxu0
      %v846 = vadd.f32 0.0, %v845
      %v847 = vpop.f32.mrf.mxu0
      %v848 = vpop.f32.mrf.mxu0
      %v849 = vadd.f32 0.0, %v848
      %v850 = vpop.f32.mrf.mxu0
      %851 = vmatprep.mubr.bf16.mxu0 %v632
      %852 = vmatmul.mubr.bf16.gmra.mxu0 %v460
      %v853 = vpop.f32.mrf.mxu0
      %v854 = vadd.f32 0.0, %v853
      %v855 = vpop.f32.mrf.mxu0
      %v856 = vpop.f32.mrf.mxu0
      %v857 = vadd.f32 0.0, %v856
      %v858 = vpop.f32.mrf.mxu0
      %859 = vmatprep.mubr.bf16.mxu0 %v635
      %860 = vmatmul.mubr.bf16.gmra.mxu0 %v462
      %v861 = vpop.f32.mrf.mxu0
      %v862 = vadd.f32 0.0, %v861
      %v863 = vpop.f32.mrf.mxu0
      %v864 = vpop.f32.mrf.mxu0
      %v865 = vadd.f32 0.0, %v864
      %v866 = vpop.f32.mrf.mxu0
      %867 = vmatprep.mubr.bf16.mxu0 %v638
      %868 = vmatmul.mubr.bf16.gmra.mxu0 %v464
      %v869 = vpop.f32.mrf.mxu0
      %v870 = vadd.f32 0.0, %v869
      %v871 = vpop.f32.mrf.mxu0
      %v872 = vpop.f32.mrf.mxu0
      %v873 = vadd.f32 0.0, %v872
      %v874 = vpop.f32.mrf.mxu0
      %875 = vmatprep.mubr.bf16.mxu0 %v641
      %876 = vmatmul.mubr.bf16.gmra.mxu0 %v466
      %v877 = vpop.f32.mrf.mxu0
      %v878 = vadd.f32 0.0, %v877
      %v879 = vpop.f32.mrf.mxu0
      %v880 = vpop.f32.mrf.mxu0
      %v881 = vadd.f32 0.0, %v880
      %v882 = vpop.f32.mrf.mxu0
      %883 = vmatprep.mubr.bf16.mxu0 %v644
      %884 = vmatmul.mubr.bf16.gmra.mxu0 %v468
      %v885 = vpop.f32.mrf.mxu0
      %v886 = vadd.f32 0.0, %v885
      %v887 = vpop.f32.mrf.mxu0
      %v888 = vpop.f32.mrf.mxu0
      %v889 = vadd.f32 0.0, %v888
      %v890 = vpop.f32.mrf.mxu0
      %891 = vmatprep.mubr.bf16.mxu0 %v647
      %892 = vmatmul.mubr.bf16.gmra.mxu0 %v470
      %v893 = vpop.f32.mrf.mxu0
      %v894 = vadd.f32 0.0, %v893
      %v895 = vpop.f32.mrf.mxu0
      %v896 = vpop.f32.mrf.mxu0
      %v897 = vadd.f32 0.0, %v896
      %v898 = vpop.f32.mrf.mxu0
      %899 = vmatprep.mubr.bf16.mxu0 %v650
      %900 = vmatmul.mubr.bf16.gmra.mxu0 %v472
      %v901 = vpop.f32.mrf.mxu0
      %v902 = vadd.f32 0.0, %v901
      %v903 = vpop.f32.mrf.mxu0
      %v904 = vpop.f32.mrf.mxu0
      %v905 = vadd.f32 0.0, %v904
      %v906 = vpop.f32.mrf.mxu0
      %907 = vmatprep.mubr.bf16.mxu0 %v653
      %908 = vmatmul.mubr.bf16.gmra.mxu0 %v474
      %v909 = vpop.f32.mrf.mxu0
      %v910 = vadd.f32 0.0, %v909
      %v911 = vpop.f32.mrf.mxu0
      %v912 = vpop.f32.mrf.mxu0
      %v913 = vadd.f32 0.0, %v912
      %v914 = vpop.f32.mrf.mxu0
      %915 = vmatprep.mubr.bf16.mxu0 %v656
      %916 = vmatmul.mubr.bf16.gmra.mxu0 %v476
      %v917 = vpop.f32.mrf.mxu0
      %v918 = vadd.f32 0.0, %v917
      %v919 = vpop.f32.mrf.mxu0
      %v920 = vpop.f32.mrf.mxu0
      %v921 = vadd.f32 0.0, %v920
      %v922 = vpop.f32.mrf.mxu0
      %923 = vmatprep.mubr.bf16.mxu0 %v659
      %924 = vmatmul.mubr.bf16.gmra.mxu0 %v478
      %v925 = vpop.f32.mrf.mxu0
      %v926 = vadd.f32 0.0, %v925
      %v927 = vpop.f32.mrf.mxu0
      %v928 = vpop.f32.mrf.mxu0
      %v929 = vadd.f32 0.0, %v928
      %v930 = vpop.f32.mrf.mxu0
      %931 = vmatprep.mubr.bf16.mxu0 %v662
      %932 = vmatmul.mubr.bf16.gmra.mxu0 %v480
      %v933 = vpop.f32.mrf.mxu0
      %v934 = vadd.f32 0.0, %v933
      %v935 = vpop.f32.mrf.mxu0
      %v936 = vpop.f32.mrf.mxu0
      %v937 = vadd.f32 0.0, %v936
      %v938 = vpop.f32.mrf.mxu0
      %939 = vmatprep.mubr.bf16.mxu0 %v665
      %940 = vmatmul.mubr.bf16.gmra.mxu0 %v482
      %v941 = vpop.f32.mrf.mxu0
      %v942 = vadd.f32 0.0, %v941
      %v943 = vpop.f32.mrf.mxu0
      %v944 = vpop.f32.mrf.mxu0
      %v945 = vadd.f32 0.0, %v944
      %v946 = vpop.f32.mrf.mxu0
      %947 = vmatprep.mubr.bf16.mxu0 %v668
      %948 = vmatmul.mubr.bf16.gmra.mxu0 %v484
      %v949 = vpop.f32.mrf.mxu0
      %v950 = vadd.f32 0.0, %v949
      %v951 = vpop.f32.mrf.mxu0
      %v952 = vpop.f32.mrf.mxu0
      %v953 = vadd.f32 0.0, %v952
      %v954 = vpop.f32.mrf.mxu0
      %955 = vmatprep.mubr.bf16.mxu0 %v671
      %956 = vmatmul.mubr.bf16.gmra.mxu0 %v486
      %v957 = vpop.f32.mrf.mxu0
      %v958 = vadd.f32 0.0, %v957
      %v959 = vpop.f32.mrf.mxu0
      %v960 = vpop.f32.mrf.mxu0
      %v961 = vadd.f32 0.0, %v960
      %v962 = vpop.f32.mrf.mxu0
      %963 = vmatprep.mubr.bf16.mxu0 %v674
      %964 = vmatmul.mubr.bf16.gmra.mxu0 %v488
      %v965 = vpop.f32.mrf.mxu0
      %v966 = vadd.f32 0.0, %v965
      %v967 = vpop.f32.mrf.mxu0
      %v968 = vpop.f32.mrf.mxu0
      %v969 = vadd.f32 0.0, %v968
      %v970 = vpop.f32.mrf.mxu0
      %971 = vdwg.mxu0
      %v972 = vmax.f32 %v718, 0.0
      %v973 = vmax.f32 %v721, 0.0
      %v974 = vmax.f32 %v726, 0.0
      %v975 = vmax.f32 %v729, 0.0
      %v976 = vmax.f32 %v734, 0.0
      %v977 = vmax.f32 %v737, 0.0
      %v978 = vmax.f32 %v742, 0.0
      %v979 = vmax.f32 %v745, 0.0
      %v980 = vmax.f32 %v750, 0.0
      %v981 = vmax.f32 %v753, 0.0
      %v982 = vmax.f32 %v758, 0.0
      %v983 = vmax.f32 %v761, 0.0
      %v984 = vmax.f32 %v766, 0.0
      %v985 = vmax.f32 %v769, 0.0
      %v986 = vmax.f32 %v774, 0.0
      %v987 = vmax.f32 %v777, 0.0
      %v988 = vmax.f32 %v782, 0.0
      %v989 = vmax.f32 %v785, 0.0
      %v990 = vmax.f32 %v790, 0.0
      %v991 = vmax.f32 %v793, 0.0
      %v992 = vmax.f32 %v798, 0.0
      %v993 = vmax.f32 %v801, 0.0
      %v994 = vmax.f32 %v806, 0.0
      %v995 = vmax.f32 %v809, 0.0
      %v996 = vmax.f32 %v814, 0.0
      %v997 = vmax.f32 %v817, 0.0
      %v998 = vmax.f32 %v822, 0.0
      %v999 = vmax.f32 %v825, 0.0
      %v1000 = vmax.f32 %v830, 0.0
      %v1001 = vmax.f32 %v833, 0.0
      %v1002 = vmax.f32 %v838, 0.0
      %v1003 = vmax.f32 %v841, 0.0
      %v1004 = vmax.f32 %v846, 0.0
      %v1005 = vmax.f32 %v849, 0.0
      %v1006 = vmax.f32 %v854, 0.0
      %v1007 = vmax.f32 %v857, 0.0
      %v1008 = vmax.f32 %v862, 0.0
      %v1009 = vmax.f32 %v865, 0.0
      %v1010 = vmax.f32 %v870, 0.0
      %v1011 = vmax.f32 %v873, 0.0
      %v1012 = vmax.f32 %v878, 0.0
      %v1013 = vmax.f32 %v881, 0.0
      %v1014 = vmax.f32 %v886, 0.0
      %v1015 = vmax.f32 %v889, 0.0
      %v1016 = vmax.f32 %v894, 0.0
      %v1017 = vmax.f32 %v897, 0.0
      %v1018 = vmax.f32 %v902, 0.0
      %v1019 = vmax.f32 %v905, 0.0
      %v1020 = vmax.f32 %v910, 0.0
      %v1021 = vmax.f32 %v913, 0.0
      %v1022 = vmax.f32 %v918, 0.0
      %v1023 = vmax.f32 %v921, 0.0
      %v1024 = vmax.f32 %v926, 0.0
      %v1025 = vmax.f32 %v929, 0.0
      %v1026 = vmax.f32 %v934, 0.0
      %v1027 = vmax.f32 %v937, 0.0
      %v1028 = vmax.f32 %v942, 0.0
      %v1029 = vmax.f32 %v945, 0.0
      %v1030 = vmax.f32 %v950, 0.0
      %v1031 = vmax.f32 %v953, 0.0
      %v1032 = vmax.f32 %v958, 0.0
      %v1033 = vmax.f32 %v961, 0.0
      %v1034 = vmax.f32 %v966, 0.0
      %v1035 = vmax.f32 %v969, 0.0
      %v1036 = vpack.c.bf16 %v973, %v972
      %v1037 = vpack.c.bf16 %v975, %v974
      %v1038 = vpack.c.bf16 %v977, %v976
      %v1039 = vpack.c.bf16 %v979, %v978
      %v1040 = vpack.c.bf16 %v981, %v980
      %v1041 = vpack.c.bf16 %v983, %v982
      %v1042 = vpack.c.bf16 %v985, %v984
      %v1043 = vpack.c.bf16 %v987, %v986
      %v1044 = vpack.c.bf16 %v989, %v988
      %v1045 = vpack.c.bf16 %v991, %v990
      %v1046 = vpack.c.bf16 %v993, %v992
      %v1047 = vpack.c.bf16 %v995, %v994
      %v1048 = vpack.c.bf16 %v997, %v996
      %v1049 = vpack.c.bf16 %v999, %v998
      %v1050 = vpack.c.bf16 %v1001, %v1000
      %v1051 = vpack.c.bf16 %v1003, %v1002
      %v1052 = vpack.c.bf16 %v1005, %v1004
      %v1053 = vpack.c.bf16 %v1007, %v1006
      %v1054 = vpack.c.bf16 %v1009, %v1008
      %v1055 = vpack.c.bf16 %v1011, %v1010
      %v1056 = vpack.c.bf16 %v1013, %v1012
      %v1057 = vpack.c.bf16 %v1015, %v1014
      %v1058 = vpack.c.bf16 %v1017, %v1016
      %v1059 = vpack.c.bf16 %v1019, %v1018
      %v1060 = vpack.c.bf16 %v1021, %v1020
      %v1061 = vpack.c.bf16 %v1023, %v1022
      %v1062 = vpack.c.bf16 %v1025, %v1024
      %v1063 = vpack.c.bf16 %v1027, %v1026
      %v1064 = vpack.c.bf16 %v1029, %v1028
      %v1065 = vpack.c.bf16 %v1031, %v1030
      %v1066 = vpack.c.bf16 %v1033, %v1032
      %v1067 = vpack.c.bf16 %v1035, %v1034
      %v1100 = vunpack.c.l.b16 %v1036
      %v1101 = vunpack.c.h.b16 %v1036
      %v1102 = vunpack.c.l.b16 %v1037
      %v1103 = vunpack.c.h.b16 %v1037
      %v1104 = vunpack.c.l.b16 %v1038
      %v1105 = vunpack.c.h.b16 %v1038
      %v1106 = vunpack.c.l.b16 %v1039
      %v1107 = vunpack.c.h.b16 %v1039
      %v1108 = vunpack.c.l.b16 %v1040
      %v1109 = vunpack.c.h.b16 %v1040
      %v1110 = vunpack.c.l.b16 %v1041
      %v1111 = vunpack.c.h.b16 %v1041
      %v1112 = vunpack.c.l.b16 %v1042
      %v1113 = vunpack.c.h.b16 %v1042
      %v1114 = vunpack.c.l.b16 %v1043
      %v1115 = vunpack.c.h.b16 %v1043
      %v1116 = vunpack.c.l.b16 %v1044
      %v1117 = vunpack.c.h.b16 %v1044
      %v1118 = vunpack.c.l.b16 %v1045
      %v1119 = vunpack.c.h.b16 %v1045
      %v1120 = vunpack.c.l.b16 %v1046
      %v1121 = vunpack.c.h.b16 %v1046
      %v1122 = vunpack.c.l.b16 %v1047
      %v1123 = vunpack.c.h.b16 %v1047
      %v1124 = vunpack.c.l.b16 %v1048
      %v1125 = vunpack.c.h.b16 %v1048
      %v1126 = vunpack.c.l.b16 %v1049
      %v1127 = vunpack.c.h.b16 %v1049
      %v1128 = vunpack.c.l.b16 %v1050
      %v1129 = vunpack.c.h.b16 %v1050
      %v1130 = vunpack.c.l.b16 %v1051
      %v1131 = vunpack.c.h.b16 %v1051
      %v1132 = vunpack.c.l.b16 %v1052
      %v1133 = vunpack.c.h.b16 %v1052
      %v1134 = vunpack.c.l.b16 %v1053
      %v1135 = vunpack.c.h.b16 %v1053
      %v1136 = vunpack.c.l.b16 %v1054
      %v1137 = vunpack.c.h.b16 %v1054
      %v1138 = vunpack.c.l.b16 %v1055
      %v1139 = vunpack.c.h.b16 %v1055
      %v1140 = vunpack.c.l.b16 %v1056
      %v1141 = vunpack.c.h.b16 %v1056
      %v1142 = vunpack.c.l.b16 %v1057
      %v1143 = vunpack.c.h.b16 %v1057
      %v1144 = vunpack.c.l.b16 %v1058
      %v1145 = vunpack.c.h.b16 %v1058
      %v1146 = vunpack.c.l.b16 %v1059
      %v1147 = vunpack.c.h.b16 %v1059
      %v1148 = vunpack.c.l.b16 %v1060
      %v1149 = vunpack.c.h.b16 %v1060
      %v1150 = vunpack.c.l.b16 %v1061
      %v1151 = vunpack.c.h.b16 %v1061
      %v1152 = vunpack.c.l.b16 %v1062
      %v1153 = vunpack.c.h.b16 %v1062
      %v1154 = vunpack.c.l.b16 %v1063
      %v1155 = vunpack.c.h.b16 %v1063
      %v1156 = vunpack.c.l.b16 %v1064
      %v1157 = vunpack.c.h.b16 %v1064
      %v1158 = vunpack.c.l.b16 %v1065
      %v1159 = vunpack.c.h.b16 %v1065
      %v1160 = vunpack.c.l.b16 %v1066
      %v1161 = vunpack.c.h.b16 %v1066
      %v1162 = vunpack.c.l.b16 %v1067
      %v1163 = vunpack.c.h.b16 %v1067
      %v1164 = vpack.c.b16 %v1100, %v1100
      %v1165 = vpack.c.b16 %v1101, %v1101
      %v1166 = vpack.c.b16 %v1102, %v1102
      %v1167 = vpack.c.b16 %v1103, %v1103
      %v1168 = vpack.c.b16 %v1104, %v1104
      %v1169 = vpack.c.b16 %v1105, %v1105
      %v1170 = vpack.c.b16 %v1106, %v1106
      %v1171 = vpack.c.b16 %v1107, %v1107
      %v1172 = vpack.c.b16 %v1108, %v1108
      %v1173 = vpack.c.b16 %v1109, %v1109
      %v1174 = vpack.c.b16 %v1110, %v1110
      %v1175 = vpack.c.b16 %v1111, %v1111
      %v1176 = vpack.c.b16 %v1112, %v1112
      %v1177 = vpack.c.b16 %v1113, %v1113
      %v1178 = vpack.c.b16 %v1114, %v1114
      %v1179 = vpack.c.b16 %v1115, %v1115
      %v1180 = vpack.c.b16 %v1116, %v1116
      %v1181 = vpack.c.b16 %v1117, %v1117
      %v1182 = vpack.c.b16 %v1118, %v1118
      %v1183 = vpack.c.b16 %v1119, %v1119
      %v1184 = vpack.c.b16 %v1120, %v1120
      %v1185 = vpack.c.b16 %v1121, %v1121
      %v1186 = vpack.c.b16 %v1122, %v1122
      %v1187 = vpack.c.b16 %v1123, %v1123
      %v1188 = vpack.c.b16 %v1124, %v1124
      %v1189 = vpack.c.b16 %v1125, %v1125
      %v1190 = vpack.c.b16 %v1126, %v1126
      %v1191 = vpack.c.b16 %v1127, %v1127
      %v1192 = vpack.c.b16 %v1128, %v1128
      %v1193 = vpack.c.b16 %v1129, %v1129
      %v1194 = vpack.c.b16 %v1130, %v1130
      %v1195 = vpack.c.b16 %v1131, %v1131
      %v1196 = vpack.c.b16 %v1132, %v1132
      %v1197 = vpack.c.b16 %v1133, %v1133
      %v1198 = vpack.c.b16 %v1134, %v1134
      %v1199 = vpack.c.b16 %v1135, %v1135
      %v1200 = vpack.c.b16 %v1136, %v1136
      %v1201 = vpack.c.b16 %v1137, %v1137
      %v1202 = vpack.c.b16 %v1138, %v1138
      %v1203 = vpack.c.b16 %v1139, %v1139
      %v1204 = vpack.c.b16 %v1140, %v1140
      %v1205 = vpack.c.b16 %v1141, %v1141
      %v1206 = vpack.c.b16 %v1142, %v1142
      %v1207 = vpack.c.b16 %v1143, %v1143
      %v1208 = vpack.c.b16 %v1144, %v1144
      %v1209 = vpack.c.b16 %v1145, %v1145
      %v1210 = vpack.c.b16 %v1146, %v1146
      %v1211 = vpack.c.b16 %v1147, %v1147
      %v1212 = vpack.c.b16 %v1148, %v1148
      %v1213 = vpack.c.b16 %v1149, %v1149
      %v1214 = vpack.c.b16 %v1150, %v1150
      %v1215 = vpack.c.b16 %v1151, %v1151
      %v1216 = vpack.c.b16 %v1152, %v1152
      %v1217 = vpack.c.b16 %v1153, %v1153
      %v1218 = vpack.c.b16 %v1154, %v1154
      %v1219 = vpack.c.b16 %v1155, %v1155
      %v1220 = vpack.c.b16 %v1156, %v1156
      %v1221 = vpack.c.b16 %v1157, %v1157
      %v1222 = vpack.c.b16 %v1158, %v1158
      %v1223 = vpack.c.b16 %v1159, %v1159
      %v1224 = vpack.c.b16 %v1160, %v1160
      %v1225 = vpack.c.b16 %v1161, %v1161
      %v1226 = vpack.c.b16 %v1162, %v1162
      %v1227 = vpack.c.b16 %v1163, %v1163
      %vm1292 = vcmask 125952
      %1293 = vst.msk [vmem:[%s148] sm:$0xf] %vm1292, %v1164
      %1294 = vst.msk [vmem:[%s148 + $0x4] sm:$0xf] %vm1292, %v1165
      %1295 = vst.msk [vmem:[%s148 + $0x8] sm:$0xf] %vm1292, %v1166
      %1296 = vst.msk [vmem:[%s148 + $0xc] sm:$0xf] %vm1292, %v1167
      %1297 = vst.msk [vmem:[%s148 + $0x10] sm:$0xf] %vm1292, %v1168
      %1298 = vst.msk [vmem:[%s148 + $0x14] sm:$0xf] %vm1292, %v1169
      %1299 = vst.msk [vmem:[%s148 + $0x18] sm:$0xf] %vm1292, %v1170
      %1300 = vst.msk [vmem:[%s148 + $0x1c] sm:$0xf] %vm1292, %v1171
      %1301 = vst.msk [vmem:[%s148 + $0x20] sm:$0xf] %vm1292, %v1172
      %1302 = vst.msk [vmem:[%s148 + $0x24] sm:$0xf] %vm1292, %v1173
      %1303 = vst.msk [vmem:[%s148 + $0x28] sm:$0xf] %vm1292, %v1174
      %1304 = vst.msk [vmem:[%s148 + $0x2c] sm:$0xf] %vm1292, %v1175
      %1305 = vst.msk [vmem:[%s148 + $0x30] sm:$0xf] %vm1292, %v1176
      %1306 = vst.msk [vmem:[%s148 + $0x34] sm:$0xf] %vm1292, %v1177
      %1307 = vst.msk [vmem:[%s148 + $0x38] sm:$0xf] %vm1292, %v1178
      %1308 = vst.msk [vmem:[%s148 + $0x3c] sm:$0xf] %vm1292, %v1179
      %1309 = vst.msk [vmem:[%s148 + $0x40] sm:$0xf] %vm1292, %v1180
      %1310 = vst.msk [vmem:[%s148 + $0x44] sm:$0xf] %vm1292, %v1181
      %1311 = vst.msk [vmem:[%s148 + $0x48] sm:$0xf] %vm1292, %v1182
      %1312 = vst.msk [vmem:[%s148 + $0x4c] sm:$0xf] %vm1292, %v1183
      %1313 = vst.msk [vmem:[%s148 + $0x50] sm:$0xf] %vm1292, %v1184
      %1314 = vst.msk [vmem:[%s148 + $0x54] sm:$0xf] %vm1292, %v1185
      %1315 = vst.msk [vmem:[%s148 + $0x58] sm:$0xf] %vm1292, %v1186
      %1316 = vst.msk [vmem:[%s148 + $0x5c] sm:$0xf] %vm1292, %v1187
      %1317 = vst.msk [vmem:[%s148 + $0x60] sm:$0xf] %vm1292, %v1188
      %1318 = vst.msk [vmem:[%s148 + $0x64] sm:$0xf] %vm1292, %v1189
      %1319 = vst.msk [vmem:[%s148 + $0x68] sm:$0xf] %vm1292, %v1190
      %1320 = vst.msk [vmem:[%s148 + $0x6c] sm:$0xf] %vm1292, %v1191
      %1321 = vst.msk [vmem:[%s148 + $0x70] sm:$0xf] %vm1292, %v1192
      %1322 = vst.msk [vmem:[%s148 + $0x74] sm:$0xf] %vm1292, %v1193
      %1323 = vst.msk [vmem:[%s148 + $0x78] sm:$0xf] %vm1292, %v1194
      %1324 = vst.msk [vmem:[%s148 + $0x7c] sm:$0xf] %vm1292, %v1195
      %1325 = vst.msk [vmem:[%s148 + $0x80] sm:$0xf] %vm1292, %v1196
      %1326 = vst.msk [vmem:[%s148 + $0x84] sm:$0xf] %vm1292, %v1197
      %1327 = vst.msk [vmem:[%s148 + $0x88] sm:$0xf] %vm1292, %v1198
      %1328 = vst.msk [vmem:[%s148 + $0x8c] sm:$0xf] %vm1292, %v1199
      %1329 = vst.msk [vmem:[%s148 + $0x90] sm:$0xf] %vm1292, %v1200
      %1330 = vst.msk [vmem:[%s148 + $0x94] sm:$0xf] %vm1292, %v1201
      %1331 = vst.msk [vmem:[%s148 + $0x98] sm:$0xf] %vm1292, %v1202
      %1332 = vst.msk [vmem:[%s148 + $0x9c] sm:$0xf] %vm1292, %v1203
      %1333 = vst.msk [vmem:[%s148 + $0xa0] sm:$0xf] %vm1292, %v1204
      %1334 = vst.msk [vmem:[%s148 + $0xa4] sm:$0xf] %vm1292, %v1205
      %1335 = vst.msk [vmem:[%s148 + $0xa8] sm:$0xf] %vm1292, %v1206
      %1336 = vst.msk [vmem:[%s148 + $0xac] sm:$0xf] %vm1292, %v1207
      %1337 = vst.msk [vmem:[%s148 + $0xb0] sm:$0xf] %vm1292, %v1208
      %1338 = vst.msk [vmem:[%s148 + $0xb4] sm:$0xf] %vm1292, %v1209
      %1339 = vst.msk [vmem:[%s148 + $0xb8] sm:$0xf] %vm1292, %v1210
      %1340 = vst.msk [vmem:[%s148 + $0xbc] sm:$0xf] %vm1292, %v1211
      %1341 = vst.msk [vmem:[%s148 + $0xc0] sm:$0xf] %vm1292, %v1212
      %1342 = vst.msk [vmem:[%s148 + $0xc4] sm:$0xf] %vm1292, %v1213
      %1343 = vst.msk [vmem:[%s148 + $0xc8] sm:$0xf] %vm1292, %v1214
      %1344 = vst.msk [vmem:[%s148 + $0xcc] sm:$0xf] %vm1292, %v1215
      %1345 = vst.msk [vmem:[%s148 + $0xd0] sm:$0xf] %vm1292, %v1216
      %1346 = vst.msk [vmem:[%s148 + $0xd4] sm:$0xf] %vm1292, %v1217
      %1347 = vst.msk [vmem:[%s148 + $0xd8] sm:$0xf] %vm1292, %v1218
      %1348 = vst.msk [vmem:[%s148 + $0xdc] sm:$0xf] %vm1292, %v1219
      %1349 = vst.msk [vmem:[%s148 + $0xe0] sm:$0xf] %vm1292, %v1220
      %1350 = vst.msk [vmem:[%s148 + $0xe4] sm:$0xf] %vm1292, %v1221
      %1351 = vst.msk [vmem:[%s148 + $0xe8] sm:$0xf] %vm1292, %v1222
      %1352 = vst.msk [vmem:[%s148 + $0xec] sm:$0xf] %vm1292, %v1223
      %1353 = vst.msk [vmem:[%s148 + $0xf0] sm:$0xf] %vm1292, %v1224
      %1354 = vst.msk [vmem:[%s148 + $0xf4] sm:$0xf] %vm1292, %v1225
      %1355 = vst.msk [vmem:[%s148 + $0xf8] sm:$0xf] %vm1292, %v1226
      %1356 = vst.msk [vmem:[%s148 + $0xfc] sm:$0xf] %vm1292, %v1227
      %s1357 = smul.u32 64, %s13
      %p1358 = scmp.lt.s32.totalorder %s1357, 255
      %s1359 = scalar_select %p1358, %s1357, 255
      %s1360 = smul.addr %s1359, 4
      %s1361 = scalar_lea.vmem %s2, %s1360
      // Predicated region
      $region29: #{tpu_custom_call.1} parent=27 // pred_check
        %p1362 = pneg %p78
      $region30: #{tpu_custom_call.1} parent=27 // pred_check_branch
        %1364 = sbr.rel (%p1362) target = $region32
      $region31: #{tpu_custom_call.1} parent=27 // pred_region
        %s1365 = smul.u32 64, %s13
      $region32: #{tpu_custom_call.1} parent=27 // pred_fallthru
        _
    $region28: #{tpu_custom_call.1} parent=5 // pred_fallthru
      _
    %p1366 = scmp.le.s32.totalorder 2, %s8
    // Predicated region
    $region33: #{tpu_custom_call.1} parent=5 // pred_check
      %p1367 = pneg %p1366
    $region34: #{tpu_custom_call.1} parent=5 // pred_check_branch
      %1369 = sbr.rel (%p1367) target = $region36
    $region35: #{tpu_custom_call.1} parent=5 // pred_region
      %s1370 = ssub.s32 %s8, 2
      // Predicated region
      $region37: #{tpu_custom_call.1} parent=35 // pred_check
        %p1371 = pneg %p84
      $region38: #{tpu_custom_call.1} parent=35 // pred_check_branch
        %1373 = sbr.rel (%p1371) target = $region40
      $region39: #{tpu_custom_call.1} parent=35 // pred_region
        %s1374 = smul.u32 64, %s14
        %p1375 = scmp.lt.s32.totalorder %s1374, 255
        %s1376 = scalar_select %p1375, %s1374, 255
        %s1377 = smul.addr %s1376, 4
        %s1378 = scalar_lea.vmem %s2, %s1377
      $region40: #{tpu_custom_call.1} parent=35 // pred_fallthru
        _
    $region36: #{tpu_custom_call.1} parent=5 // pred_fallthru
      _
  $region6: #{tpu_custom_call.1} parent=0 // loop_footer
    %s12 = sadd.s32 1, %s8
  $region7: #{tpu_custom_call.1} parent=0 // loop_footer_branch
    %7 = sbr.rel target = $region3
  $region8: #{tpu_custom_call.1} parent=0 // loop_exit
    _

</llo_original>
